<compile_context>
chip_gen: v7x
topology: tpu7x:2x2x1
jax: 0.10.0
libtpu: 0.0.40
codegen_flags: <defaults>
</compile_context>

<pallas_src>
import jax
import jax.numpy as jnp
from jax.experimental import pallas as pl
from jax.experimental.pallas import tpu as pltpu


def channel_attention_kernel(x_ref, w1t_ref, w2t_ref, o_ref):
    # x_ref  : (Bt, C, HW)  batch block of the input feature map
    # w1t_ref: (C, Ch)      = W1.T  (first 1x1 conv, C -> Ch, no bias)
    # w2t_ref: (Ch, C)      = W2.T  (second 1x1 conv, Ch -> C, no bias)
    # o_ref  : (1, Bt, C)   attention weights for this batch block
    x = x_ref[...]                                    # (Bt, C, HW), f32
    bt = x.shape[0]
    inv_hw = 1.0 / x.shape[-1]

    # Adaptive avg / max pool over the flattened spatial (lane) axis.
    # Reducing the last axis leaves (Bt, C) with C lane-major, so no
    # transposes are needed before the matmuls.
    avg = jnp.sum(x, axis=-1) * inv_hw                # (Bt, C)
    mx = jnp.max(x, axis=-1)                          # (Bt, C)

    # Fused shared MLP: stack both pooled operands so each weight matrix is
    # pushed through the MXU exactly once per grid step (2 dots, not 4).
    pooled = jnp.concatenate([avg, mx], axis=0)       # (2*Bt, C)
    h = jnp.maximum(
        jnp.dot(pooled, w1t_ref[...], preferred_element_type=jnp.float32),
        0.0)                                          # (2*Bt, Ch)
    y = jnp.dot(h, w2t_ref[...],
                preferred_element_type=jnp.float32)   # (2*Bt, C)

    out = jax.nn.sigmoid(y[:bt] + y[bt:])             # (Bt, C)
    o_ref[0] = out.astype(o_ref.dtype)


def _choose_batch_block(B, C, HW, itemsize, target_bytes=2 << 20):
    """Pick Bt (a divisor of B): blocks ~target_bytes, but keep >=2 grid
    steps when B >= 2 so both v7x TensorCores get work on the parallel axis."""
    per_sample = C * HW * itemsize
    best = 1
    for bt in range(1, B + 1):
        if B % bt == 0 and bt * per_sample <= target_bytes:
            best = bt
    if best == B and B > 1:
        for bt in range(B // 2, 0, -1):
            if B % bt == 0:
                best = bt
                break
    return best


def channel_attention(x, w1, w2):
    """x: (B, C, H, W) float32.  w1: (Ch, C, 1, 1).  w2: (C, Ch, 1, 1).

    Returns attention weights of shape (B, C, 1, 1) (not multiplied into x),
    matching the PyTorch ChannelAttention module.
    """
    B, C, H, W = x.shape
    HW = H * W
    Ch = w1.shape[0]

    x_flat = x.reshape(B, C, HW)
    w1t = w1.reshape(Ch, C).T          # (C, Ch)
    w2t = w2.reshape(C, Ch).T          # (Ch, C)

    itemsize = jnp.dtype(x.dtype).itemsize
    Bt = _choose_batch_block(B, C, HW, itemsize)
    nb = B // Bt

    # Double-buffered input block + weights + output, with headroom.
    block_bytes = Bt * C * HW * itemsize
    vmem_limit = int(min(max(4 * block_bytes + (2 << 20), 16 << 20), 48 << 20))

    out = pl.pallas_call(
        channel_attention_kernel,
        out_shape=jax.ShapeDtypeStruct((nb, Bt, C), x.dtype),
        grid_spec=pltpu.PrefetchScalarGridSpec(
            num_scalar_prefetch=0,
            grid=(nb,),
            in_specs=[
                pl.BlockSpec((Bt, C, HW), lambda b: (b, 0, 0)),
                pl.BlockSpec((C, Ch), lambda b: (0, 0)),
                pl.BlockSpec((Ch, C), lambda b: (0, 0)),
            ],
            out_specs=pl.BlockSpec((1, Bt, C), lambda b: (b, 0, 0)),
        ),
        compiler_params=pltpu.CompilerParams(
            dimension_semantics=("parallel",),
            vmem_limit_bytes=vmem_limit),
    )(x_flat, w1t, w2t)

    return out.reshape(B, C, 1, 1)


def channel_attention_ref(x, w1, w2):
    """Pure-JAX reference matching the PyTorch forward."""
    B, C, H, W = x.shape
    Ch = w1.shape[0]
    avg = jnp.mean(x, axis=(2, 3))                       # (B, C)
    mx = jnp.max(x, axis=(2, 3))                         # (B, C)
    W1 = w1.reshape(Ch, C)
    W2 = w2.reshape(C, Ch)

    def mlp(p):
        return jnp.maximum(p @ W1.T, 0.0) @ W2.T

    out = jax.nn.sigmoid(mlp(avg) + mlp(mx))
    return out.reshape(B, C, 1, 1)


if __name__ == "__main__":
    key = jax.random.PRNGKey(0)
    B, C, H, W = 2, 64, 16, 16
    ratio = 16
    Ch = C // ratio

    kx, k1, k2 = jax.random.split(key, 3)
    x = jax.random.normal(kx, (B, C, H, W), dtype=jnp.float32)
    # deterministic synthetic weights (Conv2d weight layout: (out, in, 1, 1))
    w1 = jax.random.normal(k1, (Ch, C, 1, 1), dtype=jnp.float32) * 0.1
    w2 = jax.random.normal(k2, (C, Ch, 1, 1), dtype=jnp.float32) * 0.1

    out = channel_attention(x, w1, w2)
    out = jax.block_until_ready(out)

    ref = channel_attention_ref(x, w1, w2)
    assert out.shape == (B, C, 1, 1)
    assert jnp.allclose(out, ref, atol=1e-5, rtol=1e-5), (
        float(jnp.max(jnp.abs(out - ref))))

    print("KERNEL_OK")
</pallas_src>

<mosaic_0001>
module attributes {stable_mosaic.version = 11 : i64} {
  func.func @channel_attention_kernel(%arg0: i32, %arg1: memref<1x64x256xf32, #tpu.memory_space<vmem>>, %arg2: memref<64x4xf32, #tpu.memory_space<vmem>>, %arg3: memref<4x64xf32, #tpu.memory_space<vmem>>, %arg4: memref<1x1x64xf32, #tpu.memory_space<vmem>>) attributes {dimension_semantics = [#tpu.dimension_semantics<parallel>], iteration_bounds = array<i64: 2>, scalar_prefetch = 0 : i64, scratch_operands = 0 : i64, tpu.core_type = #tpu.core_type<tc>, window_params = [{transform_indices = @transform_0, window_bounds = array<i64: 1, 64, 256>}, {pipeline_mode = #tpu.pipeline_mode<synchronous>, transform_indices = @transform_1, window_bounds = array<i64: 64, 4>}, {pipeline_mode = #tpu.pipeline_mode<synchronous>, transform_indices = @transform_2, window_bounds = array<i64: 4, 64>}, {transform_indices = @transform_3, window_bounds = array<i64: 1, 1, 64>}]} {
    %c0 = arith.constant 0 : index
    %c0_0 = arith.constant 0 : index
    %c0_1 = arith.constant 0 : index
    %0 = vector.load %arg1[%c0, %c0_0, %c0_1] : memref<1x64x256xf32, #tpu.memory_space<vmem>>, vector<1x64x256xf32>
    %cst = arith.constant dense<0.000000e+00> : vector<1x64xf32>
    %1 = vector.multi_reduction <add>, %0, %cst [2] : vector<1x64x256xf32> to vector<1x64xf32>
    %cst_2 = arith.constant 3.906250e-03 : f32
    %2 = vector.broadcast %cst_2 : f32 to vector<1x64xf32>
    %3 = arith.mulf %1, %2 : vector<1x64xf32>
    %cst_3 = arith.constant dense<0xFF800000> : vector<1x64xf32>
    %4 = vector.multi_reduction <maximumf>, %0, %cst_3 [2] : vector<1x64x256xf32> to vector<1x64xf32>
    %5 = tpu.concatenate %3, %4 in 0 : vector<1x64xf32>, vector<1x64xf32> -> vector<2x64xf32>
    %c0_4 = arith.constant 0 : index
    %c0_5 = arith.constant 0 : index
    %6 = vector.load %arg2[%c0_4, %c0_5] : memref<64x4xf32, #tpu.memory_space<vmem>>, vector<64x4xf32>
    %cst_6 = arith.constant dense<0.000000e+00> : vector<2x4xf32>
    %7 = tpu.matmul %5, %6, %cst_6 {dimension_numbers = #tpu.dot_dimension_numbers<[1], [0], [0], [1], [0, 0, 1, 1], [], []>} : vector<2x64xf32>, vector<64x4xf32>, vector<2x4xf32> -> vector<2x4xf32>
    %cst_7 = arith.constant 0.000000e+00 : f32
    %8 = vector.broadcast %cst_7 : f32 to vector<2x4xf32>
    %9 = arith.maximumf %7, %8 : vector<2x4xf32>
    %c0_8 = arith.constant 0 : index
    %c0_9 = arith.constant 0 : index
    %10 = vector.load %arg3[%c0_8, %c0_9] : memref<4x64xf32, #tpu.memory_space<vmem>>, vector<4x64xf32>
    %cst_10 = arith.constant dense<0.000000e+00> : vector<2x64xf32>
    %11 = tpu.matmul %9, %10, %cst_10 {dimension_numbers = #tpu.dot_dimension_numbers<[1], [0], [0], [1], [0, 0, 1, 1], [], []>} : vector<2x4xf32>, vector<4x64xf32>, vector<2x64xf32> -> vector<2x64xf32>
    %12 = vector.extract_strided_slice %11 {offsets = [0, 0], sizes = [1, 64], strides = [1, 1]} : vector<2x64xf32> to vector<1x64xf32>
    %13 = vector.extract_strided_slice %11 {offsets = [1, 0], sizes = [1, 64], strides = [1, 1]} : vector<2x64xf32> to vector<1x64xf32>
    %14 = arith.addf %12, %13 : vector<1x64xf32>
    %15 = arith.negf %14 : vector<1x64xf32>
    %16 = math.exp %15 : vector<1x64xf32>
    %cst_11 = arith.constant 1.000000e+00 : f32
    %17 = vector.broadcast %cst_11 : f32 to vector<1x64xf32>
    %18 = arith.addf %17, %16 : vector<1x64xf32>
    %19 = arith.divf %17, %18 : vector<1x64xf32>
    %c0_12 = arith.constant 0 : index
    %c0_13 = arith.constant 0 : index
    %c0_14 = arith.constant 0 : index
    %20 = vector.load %arg4[%c0_12, %c0_13, %c0_14] : memref<1x1x64xf32, #tpu.memory_space<vmem>>, vector<1x1x64xf32>
    %21 = vector.shape_cast %20 : vector<1x1x64xf32> to vector<1x64xf32>
    %22 = vector.shape_cast %19 : vector<1x64xf32> to vector<1x1x64xf32>
    tpu.vector_store %arg4[%c0_12, %c0_13, %c0_14], %22 {strides = array<i32>} : memref<1x1x64xf32, #tpu.memory_space<vmem>>, vector<1x1x64xf32>,
    return
  }
  func.func @transform_0(%arg0: i32) -> (i32, i32, i32) {
    %c0_i32 = arith.constant 0 : i32
    %c0_i32_0 = arith.constant 0 : i32
    %c0_i32_1 = arith.constant 0 : i32
    return %arg0, %c0_i32, %c0_i32_0 : i32, i32, i32
  }
  func.func @transform_1(%arg0: i32) -> (i32, i32) {
    %c0_i32 = arith.constant 0 : i32
    %c0_i32_0 = arith.constant 0 : i32
    %c0_i32_1 = arith.constant 0 : i32
    return %c0_i32, %c0_i32_0 : i32, i32
  }
  func.func @transform_2(%arg0: i32) -> (i32, i32) {
    %c0_i32 = arith.constant 0 : i32
    %c0_i32_0 = arith.constant 0 : i32
    %c0_i32_1 = arith.constant 0 : i32
    return %c0_i32, %c0_i32_0 : i32, i32
  }
  func.func @transform_3(%arg0: i32) -> (i32, i32, i32) {
    %c0_i32 = arith.constant 0 : i32
    %c0_i32_0 = arith.constant 0 : i32
    %c0_i32_1 = arith.constant 0 : i32
    return %arg0, %c0_i32, %c0_i32_0 : i32, i32, i32
  }
}

</mosaic_0001>

<llo_original>
// kernel: tpu_custom_call.1
$region0: #{tpu_custom_call.1}
  #allocation0 [shape = 'u32[]', space=smem, size = 0x4, offset = 0x4, fixed_abs, tag = 'smem constant byte address 0x4 - core index']
  #allocation1 [shape = 'u32[144,128]{1,0:T(1,128)}', space=vmem, size = 0x12000, scoped, tag = 'internal scratch']
  %s0 = inlined_call_operand.hbm [shape: f32[2,64,256], index: 0, kind: input, shape index: {}]
  %s1 = inlined_call_operand.vmem [shape: f32[64,4], index: 1, kind: input, shape index: {}]
  %s2 = inlined_call_operand.vmem [shape: f32[4,64], index: 2, kind: input, shape index: {}]
  %s3 = inlined_call_operand.hbm [shape: f32[2,1,64], index: 3, kind: output, shape index: {}]
  %s4 = sld [smem:[#allocation0]]
  $region49: #{tpu_custom_call.1} parent=0
    _
  %s6 = ssub.s32 1, %s4
  %s7 = scalar_select 0, %s6, %s4
  $region1: #{tpu_custom_call.1} parent=0
    #allocation2 [shape = 'u8[131072]{0}', space=vmem, size = 0x20000, scoped, tag = 'input window, operand 0']
    #allocation3 [shape = 's32[2]{0}', space=sflag, size = 0x8, scoped, tag = 'scoped memory for tpu_custom_call.1']
    #allocation4 [shape = 's32[2]{0}', space=sflag, size = 0x8, scoped, tag = 'scoped memory for tpu_custom_call.1']
    #allocation5 [shape = 'u8[1024]{0}', space=vmem, size = 0x400, scoped, tag = 'output window, operand 0']
    %8 = vsyncpa [#allocation3], 0
    %s9 = scalar_lea.sflag [#allocation3], 1
    %10 = vsyncpa %s9, 0
    %11 = vsyncpa [#allocation4], 0
    %s12 = scalar_lea.sflag [#allocation4], 1
    %13 = vsyncpa %s12, 0
    loop: start=0, step=1, limit=4
    $region2: #{tpu_custom_call.1} parent=1 // loop_pre_header
      _
    $region3: #{tpu_custom_call.1} parent=1 // loop_header
      %s15 = sphi 0, %s19
      %p16 = scmp.ge.s32.totalorder %s15, 4
      %s25 = sphi 0, %s27
      %s28 = sphi 0, %s25
      %s29 = sphi 0, %s28
      %s45 = sphi 0, %s29
      %s49 = sphi 0, %s49
      %s51 = sphi 0, %s49
      %s52 = sphi 0, %s51
      %s66 = sphi 0, %s52
      %s70 = sphi 0, %s70
      %s72 = sphi 0, %s70
      %s73 = sphi 0, %s72
      %s87 = sphi 0, %s73
      %s93 = sphi 0, %s95
      %s96 = sphi 0, %s93
      %s97 = sphi 0, %s96
      %s113 = sphi 0, %s97
    $region4: #{tpu_custom_call.1} parent=1 // loop_header_branch
      %18 = sbr.rel (%p16) target = $region8
    $region5: #{tpu_custom_call.1} parent=1 // loop_body
      %s20 = ssub.s32 %s15, 1
      %s21 = ssub.s32 %s15, 2
      %s22 = sadd.s32 %s15, 1
      %s23 = ssub.s32 %s15, %s22
      %p24 = scmp.eq.s32.totalorder %s23, 0
      %s26 = sadd.s32 %s25, 1
      %s27 = scalar_select %p24, %s25, %s26
      %p30 = pneg %p24
      %p31 = scmp.eq.s32.totalorder %s15, 1
      %p32 = por %p30, %p31
      %p33 = scmp.ne.s32.totalorder %s25, %s28
      %p34 = scmp.eq.s32.totalorder %s15, 0
      %p35 = por %p33, %p34
      %p36 = scmp.ne.s32.totalorder %s25, %s28
      %p37 = scmp.eq.s32.totalorder %s20, 1
      %p38 = por %p36, %p37
      %p39 = scmp.ne.s32.totalorder %s28, %s29
      %p40 = scmp.eq.s32.totalorder %s20, 0
      %p41 = por %p39, %p40
      %p42 = scmp.ne.s32.totalorder %s28, %s29
      %p43 = scmp.eq.s32.totalorder %s21, 1
      %p44 = por %p42, %p43
      %p46 = scmp.ne.s32.totalorder %s29, %s45
      %p47 = scmp.eq.s32.totalorder %s21, 0
      %p48 = por %p46, %p47
      %s50 = sadd.s32 %s49, 1
      %p53 = scmp.eq.s32.totalorder %s15, 1
      %p54 = scmp.ne.s32.totalorder %s49, %s51
      %p55 = scmp.eq.s32.totalorder %s15, 0
      %p56 = por %p54, %p55
      %p57 = scmp.ne.s32.totalorder %s49, %s51
      %p58 = scmp.eq.s32.totalorder %s20, 1
      %p59 = por %p57, %p58
      %p60 = scmp.ne.s32.totalorder %s51, %s52
      %p61 = scmp.eq.s32.totalorder %s20, 0
      %p62 = por %p60, %p61
      %p63 = scmp.ne.s32.totalorder %s51, %s52
      %p64 = scmp.eq.s32.totalorder %s21, 1
      %p65 = por %p63, %p64
      %p67 = scmp.ne.s32.totalorder %s52, %s66
      %p68 = scmp.eq.s32.totalorder %s21, 0
      %p69 = por %p67, %p68
      %s71 = sadd.s32 %s70, 1
      %p74 = scmp.eq.s32.totalorder %s15, 1
      %p75 = scmp.ne.s32.totalorder %s70, %s72
      %p76 = scmp.eq.s32.totalorder %s15, 0
      %p77 = por %p75, %p76
      %p78 = scmp.ne.s32.totalorder %s70, %s72
      %p79 = scmp.eq.s32.totalorder %s20, 1
      %p80 = por %p78, %p79
      %p81 = scmp.ne.s32.totalorder %s72, %s73
      %p82 = scmp.eq.s32.totalorder %s20, 0
      %p83 = por %p81, %p82
      %p84 = scmp.ne.s32.totalorder %s72, %s73
      %p85 = scmp.eq.s32.totalorder %s21, 1
      %p86 = por %p84, %p85
      %p88 = scmp.ne.s32.totalorder %s73, %s87
      %p89 = scmp.eq.s32.totalorder %s21, 0
      %p90 = por %p88, %p89
      %s91 = ssub.s32 %s15, %s22
      %p92 = scmp.eq.s32.totalorder %s91, 0
      %s94 = sadd.s32 %s93, 1
      %s95 = scalar_select %p92, %s93, %s94
      %p98 = pneg %p92
      %p99 = scmp.eq.s32.totalorder %s15, 1
      %p100 = por %p98, %p99
      %p101 = scmp.ne.s32.totalorder %s93, %s96
      %p102 = scmp.eq.s32.totalorder %s15, 0
      %p103 = por %p101, %p102
      %p104 = scmp.ne.s32.totalorder %s93, %s96
      %p105 = scmp.eq.s32.totalorder %s20, 1
      %p106 = por %p104, %p105
      %p107 = scmp.ne.s32.totalorder %s96, %s97
      %p108 = scmp.eq.s32.totalorder %s20, 0
      %p109 = por %p107, %p108
      %p110 = scmp.ne.s32.totalorder %s96, %s97
      %p111 = scmp.eq.s32.totalorder %s21, 1
      %p112 = por %p110, %p111
      %p114 = scmp.ne.s32.totalorder %s97, %s113
      %p115 = scmp.eq.s32.totalorder %s21, 0
      %p116 = por %p114, %p115
      %p117 = scmp.le.s32.totalorder 1, %s15
      %p118 = scmp.lt.s32.totalorder %s15, 3
      %p119 = pnand %p117, %p118
      %p120 = pneg %p119
      // Predicated region
      $region9: #{tpu_custom_call.1} parent=5 // pred_check
        _
      $region10: #{tpu_custom_call.1} parent=5 // pred_check_branch
        %122 = sbr.rel (%p119) target = $region12
      $region11: #{tpu_custom_call.1} parent=5 // pred_region
        %s123 = ssub.s32 %s15, 1
        // Predicated region
        $region13: #{tpu_custom_call.1} parent=11 // pred_check
          %p124 = pneg %p62
        $region14: #{tpu_custom_call.1} parent=11 // pred_check_branch
          %126 = sbr.rel (%p124) target = $region16
        $region15: #{tpu_custom_call.1} parent=11 // pred_region
          _
        $region16: #{tpu_custom_call.1} parent=11 // pred_fallthru
          _
        // Predicated region
        $region17: #{tpu_custom_call.1} parent=11 // pred_check
          %p127 = pneg %p83
        $region18: #{tpu_custom_call.1} parent=11 // pred_check_branch
          %129 = sbr.rel (%p127) target = $region20
        $region19: #{tpu_custom_call.1} parent=11 // pred_region
          _
        $region20: #{tpu_custom_call.1} parent=11 // pred_fallthru
          _
      $region12: #{tpu_custom_call.1} parent=5 // pred_fallthru
        _
      %p130 = scmp.lt.s32.totalorder %s15, 2
      // Predicated region
      $region21: #{tpu_custom_call.1} parent=5 // pred_check
        %p131 = pneg %p130
      $region22: #{tpu_custom_call.1} parent=5 // pred_check_branch
        %133 = sbr.rel (%p131) target = $region24
      $region23: #{tpu_custom_call.1} parent=5 // pred_region
        // Predicated region
        $region25: #{tpu_custom_call.1} parent=23 // pred_check
          %p134 = pneg %p35
        $region26: #{tpu_custom_call.1} parent=23 // pred_check_branch
          %136 = sbr.rel (%p134) target = $region28
        $region27: #{tpu_custom_call.1} parent=23 // pred_region
          %s137 = sand.u32 %s25, 1
          %s138 = scalar_lea.sflag [#allocation3], %s137
          %s139 = sand.u32 %s25, 1
          %s140 = smul.addr %s139, 128
          %s141 = scalar_lea.vmem [#allocation2], %s140
          %s143 = ssub.s32 2048, 2048
          %144 = vsyncadd %s138, %s143
          %s145 = smul.addr %s15, 16
          %s146 = smul.addr %s145, 128
          %s147 = scalar_lea.hbm %s0, %s146
          %s148 = sshll.u32 %s141, 4
          %s149 = int_to_ptr.vmem [resolvable:$true] %s148
          %154 = dma.hbm_to_vmem [thread:$0]  %s147, 2048, %s149, %s138, 256, 256, 16
        $region28: #{tpu_custom_call.1} parent=23 // pred_fallthru
          _
      $region24: #{tpu_custom_call.1} parent=5 // pred_fallthru
        _
      %p155 = scmp.le.s32.totalorder 1, %s15
      %p156 = scmp.lt.s32.totalorder %s15, 3
      %p157 = pnand %p155, %p156
      %p158 = pneg %p157
      // Predicated region
      $region29: #{tpu_custom_call.1} parent=5 // pred_check
        _
      $region30: #{tpu_custom_call.1} parent=5 // pred_check_branch
        %160 = sbr.rel (%p157) target = $region32
      $region31: #{tpu_custom_call.1} parent=5 // pred_region
        %s161 = ssub.s32 %s15, 1
        %s162 = sand.u32 %s28, 1
        %s163 = scalar_lea.sflag [#allocation3], %s162
        %s164 = sand.u32 %s28, 1
        %s165 = smul.addr %s164, 128
        %s166 = scalar_lea.vmem [#allocation2], %s165
        // Predicated region
        $region33: #{tpu_custom_call.1} parent=31 // pred_check
          %p167 = pneg %p41
        $region34: #{tpu_custom_call.1} parent=31 // pred_check_branch
          %169 = sbr.rel (%p167) target = $region36
        $region35: #{tpu_custom_call.1} parent=31 // pred_region
          %170 = dma.done %s163, 2048
        $region36: #{tpu_custom_call.1} parent=31 // pred_fallthru
          _
        %s171 = sand.u32 %s28, 1
        %s172 = scalar_lea.sflag [#allocation3], %s171
        %s173 = sand.u32 %s28, 1
        %s174 = smul.addr %s173, 128
        %s175 = scalar_lea.vmem [#allocation2], %s174
        %p176 = pneg %p41
        %p177 = pneg %p38
        %p178 = pneg %p62
        %p179 = pneg %p59
        %p180 = pneg %p83
        %p181 = pneg %p80
        %p182 = pneg %p109
        %p183 = pneg %p106
        %s184 = sand.u32 %s96, 1
        %s185 = scalar_lea.sflag [#allocation4], %s184
        %s186 = sand.u32 %s96, 1
        %s187 = scalar_lea.vmem [#allocation5], %s186
        %v188 = vld [vmem:[%s166] sm:$0xff]
        %v189 = vld [vmem:[%s166 + $0x8] sm:$0xff]
        %v190 = vld [vmem:[%s166 + $0x10] sm:$0xff]
        %v191 = vld [vmem:[%s166 + $0x18] sm:$0xff]
        %v192 = vld [vmem:[%s166 + $0x20] sm:$0xff]
        %v193 = vld [vmem:[%s166 + $0x28] sm:$0xff]
        %v194 = vld [vmem:[%s166 + $0x30] sm:$0xff]
        %v195 = vld [vmem:[%s166 + $0x38] sm:$0xff]
        %v196 = vld [vmem:[%s166 + $0x40] sm:$0xff]
        %v197 = vld [vmem:[%s166 + $0x48] sm:$0xff]
        %v198 = vld [vmem:[%s166 + $0x50] sm:$0xff]
        %v199 = vld [vmem:[%s166 + $0x58] sm:$0xff]
        %v200 = vld [vmem:[%s166 + $0x60] sm:$0xff]
        %v201 = vld [vmem:[%s166 + $0x68] sm:$0xff]
        %v202 = vld [vmem:[%s166 + $0x70] sm:$0xff]
        %v203 = vld [vmem:[%s166 + $0x78] sm:$0xff]
        %v204 = vadd.f32 %v188, %v189
        %205 = vadd.xlane.f32.xlu0 %v204
        %v206 = vpop.xlane.xlu0 %205
        %v207 = vadd.f32 %v190, %v191
        %208 = vadd.xlane.f32.xlu0 %v207
        %v209 = vpop.xlane.xlu0 %208
        %v210 = vadd.f32 %v192, %v193
        %211 = vadd.xlane.f32.xlu0 %v210
        %v212 = vpop.xlane.xlu0 %211
        %v213 = vadd.f32 %v194, %v195
        %214 = vadd.xlane.f32.xlu0 %v213
        %v215 = vpop.xlane.xlu0 %214
        %v216 = vadd.f32 %v196, %v197
        %217 = vadd.xlane.f32.xlu0 %v216
        %v218 = vpop.xlane.xlu0 %217
        %v219 = vadd.f32 %v198, %v199
        %220 = vadd.xlane.f32.xlu0 %v219
        %v221 = vpop.xlane.xlu0 %220
        %v222 = vadd.f32 %v200, %v201
        %223 = vadd.xlane.f32.xlu0 %v222
        %v224 = vpop.xlane.xlu0 %223
        %v225 = vadd.f32 %v202, %v203
        %226 = vadd.xlane.f32.xlu0 %v225
        %v227 = vpop.xlane.xlu0 %226
        %v228 = vmul.f32 %v206, 0.00390625
        %v229 = vmul.f32 %v209, 0.00390625
        %v230 = vmul.f32 %v212, 0.00390625
        %v231 = vmul.f32 %v215, 0.00390625
        %v232 = vmul.f32 %v218, 0.00390625
        %v233 = vmul.f32 %v221, 0.00390625
        %v234 = vmul.f32 %v224, 0.00390625
        %v235 = vmul.f32 %v227, 0.00390625
        %v236 = vmax.f32 %v188, %v189
        %237 = vmax.xlane.f32.xlu0 %v236
        %v238 = vpop.xlane.xlu0 %237
        %v239 = vmax.f32 %v190, %v191
        %240 = vmax.xlane.f32.xlu0 %v239
        %v241 = vpop.xlane.xlu0 %240
        %v242 = vmax.f32 %v192, %v193
        %243 = vmax.xlane.f32.xlu0 %v242
        %v244 = vpop.xlane.xlu0 %243
        %v245 = vmax.f32 %v194, %v195
        %246 = vmax.xlane.f32.xlu0 %v245
        %v247 = vpop.xlane.xlu0 %246
        %v248 = vmax.f32 %v196, %v197
        %249 = vmax.xlane.f32.xlu0 %v248
        %v250 = vpop.xlane.xlu0 %249
        %v251 = vmax.f32 %v198, %v199
        %252 = vmax.xlane.f32.xlu0 %v251
        %v253 = vpop.xlane.xlu0 %252
        %v254 = vmax.f32 %v200, %v201
        %255 = vmax.xlane.f32.xlu0 %v254
        %v256 = vpop.xlane.xlu0 %255
        %v257 = vmax.f32 %v202, %v203
        %258 = vmax.xlane.f32.xlu0 %v257
        %v259 = vpop.xlane.xlu0 %258
        %v268 = vlaneseq
        %v269 = vand.u32 %v268, 127
        %v270 = vlaneseq
        %v271 = vshrl.u32 %v270, 7
        %v272 = vsub.s32 %v269, %v271
        %v273 = vrot.slane %v228, %v272
        %v274 = vadd.s32 %v269, 4294967288
        %v275 = vlaneseq
        %v276 = vshrl.u32 %v275, 7
        %v277 = vsub.s32 %v274, %v276
        %v278 = vrot.slane %v229, %v277
        %vm279 = vcmask 130112
        %v280 = vsel %vm279, %v278, %v273
        %v281 = vadd.s32 %v269, 4294967280
        %v282 = vlaneseq
        %v283 = vshrl.u32 %v282, 7
        %v284 = vsub.s32 %v281, %v283
        %v285 = vrot.slane %v230, %v284
        %vm286 = vcmask 195712
        %v287 = vsel %vm286, %v285, %v280
        %v288 = vadd.s32 %v269, 4294967272
        %v289 = vlaneseq
        %v290 = vshrl.u32 %v289, 7
        %v291 = vsub.s32 %v288, %v290
        %v292 = vrot.slane %v231, %v291
        %vm293 = vcmask 261312
        %v294 = vsel %vm293, %v292, %v287
        %v295 = vadd.s32 %v269, 4294967264
        %v296 = vlaneseq
        %v297 = vshrl.u32 %v296, 7
        %v298 = vsub.s32 %v295, %v297
        %v299 = vrot.slane %v232, %v298
        %vm300 = vcmask 326912
        %v301 = vsel %vm300, %v299, %v294
        %v302 = vadd.s32 %v269, 4294967256
        %v303 = vlaneseq
        %v304 = vshrl.u32 %v303, 7
        %v305 = vsub.s32 %v302, %v304
        %v306 = vrot.slane %v233, %v305
        %vm307 = vcmask 392512
        %v308 = vsel %vm307, %v306, %v301
        %v309 = vadd.s32 %v269, 4294967248
        %v310 = vlaneseq
        %v311 = vshrl.u32 %v310, 7
        %v312 = vsub.s32 %v309, %v311
        %v313 = vrot.slane %v234, %v312
        %vm314 = vcmask 458112
        %v315 = vsel %vm314, %v313, %v308
        %v316 = vadd.s32 %v269, 4294967240
        %v317 = vlaneseq
        %v318 = vshrl.u32 %v317, 7
        %v319 = vsub.s32 %v316, %v318
        %v320 = vrot.slane %v235, %v319
        %vm321 = vcmask 523712
        %v322 = vsel %vm321, %v320, %v315
        %v332 = vlaneseq
        %v333 = vshrl.u32 %v332, 7
        %v334 = vsub.s32 %v269, %v333
        %v335 = vrot.slane %v238, %v334
        %v336 = vlaneseq
        %v337 = vshrl.u32 %v336, 7
        %v338 = vsub.s32 %v274, %v337
        %v339 = vrot.slane %v241, %v338
        %v340 = vsel %vm279, %v339, %v335
        %v341 = vlaneseq
        %v342 = vshrl.u32 %v341, 7
        %v343 = vsub.s32 %v281, %v342
        %v344 = vrot.slane %v244, %v343
        %v345 = vsel %vm286, %v344, %v340
        %v346 = vlaneseq
        %v347 = vshrl.u32 %v346, 7
        %v348 = vsub.s32 %v288, %v347
        %v349 = vrot.slane %v247, %v348
        %v350 = vsel %vm293, %v349, %v345
        %v351 = vlaneseq
        %v352 = vshrl.u32 %v351, 7
        %v353 = vsub.s32 %v295, %v352
        %v354 = vrot.slane %v250, %v353
        %v355 = vsel %vm300, %v354, %v350
        %v356 = vlaneseq
        %v357 = vshrl.u32 %v356, 7
        %v358 = vsub.s32 %v302, %v357
        %v359 = vrot.slane %v253, %v358
        %v360 = vsel %vm307, %v359, %v355
        %v361 = vlaneseq
        %v362 = vshrl.u32 %v361, 7
        %v363 = vsub.s32 %v309, %v362
        %v364 = vrot.slane %v256, %v363
        %v365 = vsel %vm314, %v364, %v360
        %v366 = vlaneseq
        %v367 = vshrl.u32 %v366, 7
        %v368 = vsub.s32 %v316, %v367
        %v369 = vrot.slane %v259, %v368
        %v370 = vsel %vm321, %v369, %v365
        %vm372 = vcmask 1040384
        %v373 = vsel %vm372, %v322, %v370
        %v374 = vld [vmem:[%s1] sm:$0xff]
        %v375 = vld [vmem:[%s1 + $0x8] sm:$0xff]
        %v376 = vld [vmem:[%s1 + $0x10] sm:$0xff]
        %v377 = vld [vmem:[%s1 + $0x18] sm:$0xff]
        %v378 = vld [vmem:[%s1 + $0x20] sm:$0xff]
        %v379 = vld [vmem:[%s1 + $0x28] sm:$0xff]
        %v380 = vld [vmem:[%s1 + $0x30] sm:$0xff]
        %v381 = vld [vmem:[%s1 + $0x38] sm:$0xff]
        %vm382 = vcmask 523264
        %v384 = vsel %vm382, %v373, 0
        %386 = vmatprep.subr.mxu0 0.0
        %387 = vmatpush1.msra.mxu0 %v374
        %388 = vmatprep.subr.mxu0 0.0
        %389 = vmatpush1.msra.mxu0 %v375
        %390 = vmatprep.subr.mxu0 0.0
        %391 = vmatpush1.msra.mxu0 %v376
        %392 = vmatprep.subr.mxu0 0.0
        %393 = vmatpush1.msra.mxu0 %v377
        %394 = vmatprep.subr.mxu0 0.0
        %395 = vmatpush1.msra.mxu0 %v378
        %396 = vmatprep.subr.mxu0 0.0
        %397 = vmatpush1.msra.mxu0 %v379
        %398 = vmatprep.subr.mxu0 0.0
        %399 = vmatpush1.msra.mxu0 %v380
        %400 = vmatprep.subr.mxu0 0.0
        %401 = vmatpush1.msra.mxu0 %v381
        %402 = vmatprep.subr.mxu0 0.0
        %403 = vmatpush1.msra.mxu0 0.0
        %404 = vmatprep.subr.mxu0 0.0
        %405 = vmatpush1.msra.mxu0 0.0
        %406 = vmatprep.subr.mxu0 0.0
        %407 = vmatpush1.msra.mxu0 0.0
        %408 = vmatprep.subr.mxu0 0.0
        %409 = vmatpush1.msra.mxu0 0.0
        %410 = vmatprep.subr.mxu0 0.0
        %411 = vmatpush1.msra.mxu0 0.0
        %412 = vmatprep.subr.mxu0 0.0
        %413 = vmatpush1.msra.mxu0 0.0
        %414 = vmatprep.subr.mxu0 0.0
        %415 = vmatpush1.msra.mxu0 0.0
        %416 = vmatprep.subr.mxu0 0.0
        %417 = vmatpush1.msra.mxu0 0.0
        %418 = vmatprep.subr.mxu0 0.0
        %419 = vmatpush1.msra.mxu0 0.0
        %420 = vmatprep.subr.mxu0 0.0
        %421 = vmatpush1.msra.mxu0 0.0
        %422 = vmatprep.subr.mxu0 0.0
        %423 = vmatpush1.msra.mxu0 0.0
        %424 = vmatprep.subr.mxu0 0.0
        %425 = vmatpush1.msra.mxu0 0.0
        %426 = vmatprep.subr.mxu0 0.0
        %427 = vmatpush1.msra.mxu0 0.0
        %428 = vmatprep.subr.mxu0 0.0
        %429 = vmatpush1.msra.mxu0 0.0
        %430 = vmatprep.subr.mxu0 0.0
        %431 = vmatpush1.msra.mxu0 0.0
        %432 = vmatprep.subr.mxu0 0.0
        %433 = vmatpush1.msra.mxu0 0.0
        %434 = vmatprep.subr.mxu0 0.0
        %435 = vmatpush1.msra.mxu0 0.0
        %436 = vmatprep.subr.mxu0 0.0
        %437 = vmatpush1.msra.mxu0 0.0
        %438 = vmatprep.subr.mxu0 0.0
        %439 = vmatpush1.msra.mxu0 0.0
        %440 = vmatprep.subr.mxu0 0.0
        %441 = vmatpush1.msra.mxu0 0.0
        %442 = vmatprep.subr.mxu0 0.0
        %443 = vmatpush1.msra.mxu0 0.0
        %444 = vmatprep.subr.mxu0 0.0
        %445 = vmatpush1.msra.mxu0 0.0
        %446 = vmatprep.subr.mxu0 0.0
        %447 = vmatpush1.msra.mxu0 0.0
        %448 = vmatprep.subr.mxu0 0.0
        %449 = vmatpush1.msra.mxu0 0.0
        %450 = vmatprep.mubr.f32.mxu0 0.0
        %451 = vmatmul.mubr.f32.gmra.mrb[0].mxu0 %v384
        %v452 = vpop.f32.mrb[0].mxu0
        %v453 = vadd.f32 0.0, %v452
        %v454 = vpop.f32.mrb[0].mxu0
        %455 = vdwg.mxu0
        %v456 = vmax.f32 %v453, 0.0
        %v457 = vld [vmem:[%s2] sm:$0xf]
        %vm458 = vcmask 31744
        %v460 = vsel %vm458, %v456, 0
        %vm462 = vcmask 1043456
        %v464 = vsel %vm462, %v457, 0
        %466 = vmatprep.subr.mxu0 0.0
        %467 = vmatpush1.msra.mxu0 %v464
        %468 = vmatprep.subr.mxu0 0.0
        %469 = vmatpush1.msra.mxu0 0.0
        %470 = vmatprep.subr.mxu0 0.0
        %471 = vmatpush1.msra.mxu0 0.0
        %472 = vmatprep.subr.mxu0 0.0
        %473 = vmatpush1.msra.mxu0 0.0
        %474 = vmatprep.subr.mxu0 0.0
        %475 = vmatpush1.msra.mxu0 0.0
        %476 = vmatprep.subr.mxu0 0.0
        %477 = vmatpush1.msra.mxu0 0.0
        %478 = vmatprep.subr.mxu0 0.0
        %479 = vmatpush1.msra.mxu0 0.0
        %480 = vmatprep.subr.mxu0 0.0
        %481 = vmatpush1.msra.mxu0 0.0
        %482 = vmatprep.subr.mxu0 0.0
        %483 = vmatpush1.msra.mxu0 0.0
        %484 = vmatprep.subr.mxu0 0.0
        %485 = vmatpush1.msra.mxu0 0.0
        %486 = vmatprep.subr.mxu0 0.0
        %487 = vmatpush1.msra.mxu0 0.0
        %488 = vmatprep.subr.mxu0 0.0
        %489 = vmatpush1.msra.mxu0 0.0
        %490 = vmatprep.subr.mxu0 0.0
        %491 = vmatpush1.msra.mxu0 0.0
        %492 = vmatprep.subr.mxu0 0.0
        %493 = vmatpush1.msra.mxu0 0.0
        %494 = vmatprep.subr.mxu0 0.0
        %495 = vmatpush1.msra.mxu0 0.0
        %496 = vmatprep.subr.mxu0 0.0
        %497 = vmatpush1.msra.mxu0 0.0
        %498 = vmatprep.subr.mxu0 0.0
        %499 = vmatpush1.msra.mxu0 0.0
        %500 = vmatprep.subr.mxu0 0.0
        %501 = vmatpush1.msra.mxu0 0.0
        %502 = vmatprep.subr.mxu0 0.0
        %503 = vmatpush1.msra.mxu0 0.0
        %504 = vmatprep.subr.mxu0 0.0
        %505 = vmatpush1.msra.mxu0 0.0
        %506 = vmatprep.subr.mxu0 0.0
        %507 = vmatpush1.msra.mxu0 0.0
        %508 = vmatprep.subr.mxu0 0.0
        %509 = vmatpush1.msra.mxu0 0.0
        %510 = vmatprep.subr.mxu0 0.0
        %511 = vmatpush1.msra.mxu0 0.0
        %512 = vmatprep.subr.mxu0 0.0
        %513 = vmatpush1.msra.mxu0 0.0
        %514 = vmatprep.subr.mxu0 0.0
        %515 = vmatpush1.msra.mxu0 0.0
        %516 = vmatprep.subr.mxu0 0.0
        %517 = vmatpush1.msra.mxu0 0.0
        %518 = vmatprep.subr.mxu0 0.0
        %519 = vmatpush1.msra.mxu0 0.0
        %520 = vmatprep.subr.mxu0 0.0
        %521 = vmatpush1.msra.mxu0 0.0
        %522 = vmatprep.subr.mxu0 0.0
        %523 = vmatpush1.msra.mxu0 0.0
        %524 = vmatprep.subr.mxu0 0.0
        %525 = vmatpush1.msra.mxu0 0.0
        %526 = vmatprep.subr.mxu0 0.0
        %527 = vmatpush1.msra.mxu0 0.0
        %528 = vmatprep.subr.mxu0 0.0
        %529 = vmatpush1.msra.mxu0 0.0
        %530 = vmatprep.mubr.f32.mxu0 0.0
        %531 = vmatmul.mubr.f32.gmra.mrb[0].mxu0 %v460
        %v532 = vpop.f32.mrb[0].mxu0
        %v533 = vadd.f32 0.0, %v532
        %v534 = vpop.f32.mrb[0].mxu0
        %535 = vdwg.mxu0
        %v537 = vrot.slane %v533, 1
        %v539 = vadd.f32 %v533, %v537
        %v540 = vxor.u32 %v539, 2147483648
        %v541 = vmul.f32 %v540, 1.442695
        %v542 = vpow.pop %v541
        %v543 = vadd.f32 %v542, 1.0
        %v544 = vrcp.pop %v543
        %v545 = vmul.f32 1.0, %v544
        %vm546 = vcmask 516096
        %547 = vst.msk [vmem:[%s187] sm:$0x1] %vm546, %v545
        %s548 = sand.u32 %s96, 1
        %s549 = scalar_lea.sflag [#allocation4], %s548
        %s550 = sand.u32 %s96, 1
        %s551 = scalar_lea.vmem [#allocation5], %s550
        // Predicated region
        $region37: #{tpu_custom_call.1} parent=31 // pred_check
          %p552 = pneg %p106
        $region38: #{tpu_custom_call.1} parent=31 // pred_check_branch
          %554 = sbr.rel (%p552) target = $region40
        $region39: #{tpu_custom_call.1} parent=31 // pred_region
          %s556 = ssub.s32 16, 16
          %557 = vsyncadd %s549, %s556
          %s558 = smul.addr %s20, 16
          %s559 = scalar_lea.hbm %s3, %s558
          %s561 = sshll.u32 %s551, 4
          %s562 = int_to_ptr.vmem [resolvable:$true] %s561
          %564 = dma.vmem_to_hbm [thread:$0]  %s562, 16, %s559, %s549
        $region40: #{tpu_custom_call.1} parent=31 // pred_fallthru
          _
      $region32: #{tpu_custom_call.1} parent=5 // pred_fallthru
        _
      %p565 = scmp.le.s32.totalorder 2, %s15
      // Predicated region
      $region41: #{tpu_custom_call.1} parent=5 // pred_check
        %p566 = pneg %p565
      $region42: #{tpu_custom_call.1} parent=5 // pred_check_branch
        %568 = sbr.rel (%p566) target = $region44
      $region43: #{tpu_custom_call.1} parent=5 // pred_region
        %s569 = ssub.s32 %s15, 2
        // Predicated region
        $region45: #{tpu_custom_call.1} parent=43 // pred_check
          %p570 = pneg %p112
        $region46: #{tpu_custom_call.1} parent=43 // pred_check_branch
          %572 = sbr.rel (%p570) target = $region48
        $region47: #{tpu_custom_call.1} parent=43 // pred_region
          %s573 = sand.u32 %s97, 1
          %s574 = scalar_lea.sflag [#allocation4], %s573
          %s575 = sand.u32 %s97, 1
          %s576 = scalar_lea.vmem [#allocation5], %s575
          %577 = dma.done %s574, 16
        $region48: #{tpu_custom_call.1} parent=43 // pred_fallthru
          _
      $region44: #{tpu_custom_call.1} parent=5 // pred_fallthru
        _
    $region6: #{tpu_custom_call.1} parent=1 // loop_footer
      %s19 = sadd.s32 1, %s15
    $region7: #{tpu_custom_call.1} parent=1 // loop_footer_branch
      %14 = sbr.rel target = $region3
    $region8: #{tpu_custom_call.1} parent=1 // loop_exit
      _
    %578 = vsyncpa [#allocation3], 1
    %s579 = scalar_lea.sflag [#allocation3], 1
    %580 = vsyncpa %s579, 1
    %581 = vsyncpa [#allocation4], 1
    %s582 = scalar_lea.sflag [#allocation4], 1
    %583 = vsyncpa %s582, 1

</llo_original>
